<compile_context>
chip_gen: v7x
topology: tpu7x:2x2x1
jax: 0.10.0
libtpu: 0.0.40
codegen_flags: <defaults>
</compile_context>

<pallas_src>
import jax
import jax.numpy as jnp
from jax.experimental import pallas as pl
from jax.experimental.pallas import tpu as pltpu


def _round_up(x, m):
    return ((x + m - 1) // m) * m


_VMEM_LIMIT = 64 * 1024 * 1024  # safe on v5e/v6e (128 MiB phys) and v7x (64 MiB)


# ----------------------------------------------------------------------------
# Kernel 1: fused image_encoder (patch-embed conv-as-matmul) + image_projection
# ----------------------------------------------------------------------------
def _image_encode_project_kernel(p_ref, w1_ref, b1_ref, w2_ref, b2_ref, o_ref):
    """o = (patches @ w_patch + b_patch) @ w_proj + b_proj, chained on the MXU."""
    feats = jnp.dot(p_ref[...], w1_ref[...], preferred_element_type=jnp.float32)
    feats = (feats + b1_ref[...]).astype(jnp.bfloat16)  # keep intermediate bf16
    proj = jnp.dot(feats, w2_ref[...], preferred_element_type=jnp.float32)
    o_ref[...] = (proj + b2_ref[...]).astype(o_ref.dtype)


def pallas_image_encode_project(patches, w1, b1, w2, b2, *, tm=128):
    """patches: [M, Kp] f32/bf16, w1: [Kp, d_img] bf16, w2: [d_img, d_model] bf16."""
    M, K = patches.shape
    d_img = w1.shape[1]
    d_model = w2.shape[1]

    # Sublane-aligned row tile; pad M up to a tile multiple (sliced off below).
    tm_eff = min(tm, _round_up(M, 8))
    Mp = _round_up(M, tm_eff)

    xp = patches.astype(jnp.bfloat16)
    if Mp != M:
        xp = jnp.pad(xp, ((0, Mp - M), (0, 0)))

    flops = 2 * Mp * (K * d_img + d_img * d_model)
    bytes_accessed = (xp.size * 2 + w1.size * 2 + w2.size * 2
                      + (b1.size + b2.size) * 4 + Mp * d_model * 2)
    cost = pl.CostEstimate(flops=flops, transcendentals=0,
                           bytes_accessed=bytes_accessed)

    out = pl.pallas_call(
        _image_encode_project_kernel,
        out_shape=jax.ShapeDtypeStruct((Mp, d_model), jnp.bfloat16),
        grid_spec=pltpu.PrefetchScalarGridSpec(
            num_scalar_prefetch=0,
            grid=(Mp // tm_eff,),
            in_specs=[
                pl.BlockSpec((tm_eff, K), lambda i: (i, 0)),
                # patch/proj weights are small (<= a few MiB bf16): keep resident.
                pl.BlockSpec((K, d_img), lambda i: (0, 0)),
                pl.BlockSpec((1, d_img), lambda i: (0, 0)),
                pl.BlockSpec((d_img, d_model), lambda i: (0, 0)),
                pl.BlockSpec((1, d_model), lambda i: (0, 0)),
            ],
            out_specs=pl.BlockSpec((tm_eff, d_model), lambda i: (i, 0)),
        ),
        compiler_params=pltpu.CompilerParams(
            dimension_semantics=("parallel",),
            vmem_limit_bytes=_VMEM_LIMIT,
        ),
        cost_estimate=cost,
    )(xp, w1, b1, w2, b2)
    return out[:M]


# ----------------------------------------------------------------------------
# Kernel 2: multimodal block  o = LayerNorm(GELU(x @ w + b)) * gamma + beta
#           K-tiled reduction with f32 VMEM accumulator (P3 pattern).
# ----------------------------------------------------------------------------
def _mm_fused_kernel(x_ref, w_ref, b_ref, g_ref, beta_ref, o_ref, acc_ref):
    k = pl.program_id(1)

    @pl.when(k == 0)
    def _():
        acc_ref[...] = jnp.zeros_like(acc_ref)

    acc_ref[...] += jnp.dot(x_ref[...], w_ref[...],
                            preferred_element_type=jnp.float32)

    @pl.when(k == pl.num_programs(1) - 1)
    def _():
        h = acc_ref[...] + b_ref[...]
        # TODO(synk): PyTorch nn.GELU defaults to exact erf; tanh-approx GELU is
        # used here (erf lowering availability varies across Mosaic versions).
        h = jax.nn.gelu(h)
        # One-pass LayerNorm stats: var = E[h^2] - mean^2 (f32 epilogue).
        mean = jnp.mean(h, axis=-1, keepdims=True)
        meansq = jnp.mean(h * h, axis=-1, keepdims=True)
        var = meansq - mean * mean
        hn = (h - mean) * jax.lax.rsqrt(var + 1e-5)
        o_ref[...] = (hn * g_ref[...] + beta_ref[...]).astype(o_ref.dtype)


def pallas_multimodal_block(x, w, b, gamma, beta, *, tm=128, tk=512):
    """x: [M, K] (bf16/f32), w: [K, D] bf16, b/gamma/beta: [1, D] f32 -> [M, D] f32."""
    M, K = x.shape
    D = w.shape[1]

    tm_eff = min(tm, _round_up(M, 8))       # sublane-aligned row tile
    Mp = _round_up(M, tm_eff)
    tk_eff = min(tk, _round_up(K, 128))     # lane-aligned reduction tile
    Kp = _round_up(K, tk_eff)

    xp = x.astype(jnp.bfloat16)
    if (Mp, Kp) != (M, K):
        xp = jnp.pad(xp, ((0, Mp - M), (0, Kp - K)))
    wp = w if Kp == K else jnp.pad(w, ((0, Kp - K), (0, 0)))

    flops = 2 * Mp * Kp * D
    bytes_accessed = (xp.size * 2 + wp.size * 2
                      + (b.size + gamma.size + beta.size) * 4 + Mp * D * 4)
    cost = pl.CostEstimate(flops=flops, transcendentals=2 * Mp * D,
                           bytes_accessed=bytes_accessed)

    out = pl.pallas_call(
        _mm_fused_kernel,
        out_shape=jax.ShapeDtypeStruct((Mp, D), jnp.float32),
        grid_spec=pltpu.PrefetchScalarGridSpec(
            num_scalar_prefetch=0,
            grid=(Mp // tm_eff, Kp // tk_eff),
            in_specs=[
                pl.BlockSpec((tm_eff, tk_eff), lambda i, k: (i, k)),
                pl.BlockSpec((tk_eff, D), lambda i, k: (k, 0)),
                pl.BlockSpec((1, D), lambda i, k: (0, 0)),
                pl.BlockSpec((1, D), lambda i, k: (0, 0)),
                pl.BlockSpec((1, D), lambda i, k: (0, 0)),
            ],
            out_specs=pl.BlockSpec((tm_eff, D), lambda i, k: (i, 0)),
            scratch_shapes=[pltpu.VMEM((tm_eff, D), jnp.float32)],
        ),
        compiler_params=pltpu.CompilerParams(
            dimension_semantics=("parallel", "arbitrary"),
            vmem_limit_bytes=_VMEM_LIMIT,
        ),
        cost_estimate=cost,
    )(xp, wp, b, gamma, beta)
    return out[:M]


# ----------------------------------------------------------------------------
# LLaVA model (JAX glue around the Pallas hot paths)
# ----------------------------------------------------------------------------
class LLaVAPallas:
    def __init__(self, *, channels, patch, d_img, d_model, vocab, key):
        self.patch = patch
        self.d_model = d_model
        patch_dim = channels * patch * patch
        k = jax.random.split(key, 4)
        s = 0.02
        # image_encoder: patch-embedding conv (stride == kernel) as matmul (bf16 weights)
        self.w_patch = (s * jax.random.normal(k[0], (patch_dim, d_img), jnp.float32)
                        ).astype(jnp.bfloat16)
        self.b_patch = jnp.zeros((1, d_img), jnp.float32)
        # image_projection: Linear(d_img -> d_model)
        self.w_proj = (s * jax.random.normal(k[1], (d_img, d_model), jnp.float32)
                       ).astype(jnp.bfloat16)
        self.b_proj = jnp.zeros((1, d_model), jnp.float32)
        # text_encoder: token embedding table (bf16 to match image-path activations)
        self.embed = (s * jax.random.normal(k[2], (vocab, d_model), jnp.float32)
                      ).astype(jnp.bfloat16)
        # multimodal_encoder: fused Linear + GELU + LayerNorm
        self.w_mm = (s * jax.random.normal(k[3], (d_model, d_model), jnp.float32)
                     ).astype(jnp.bfloat16)
        self.b_mm = jnp.zeros((1, d_model), jnp.float32)
        self.ln_gamma = jnp.ones((1, d_model), jnp.float32)
        self.ln_beta = jnp.zeros((1, d_model), jnp.float32)

    def _patchify(self, image):
        # image: [B, C, H, W] (NCHW) -> patches [B*Np, C*p*p]  (pure reshape glue)
        B, C, H, W = image.shape
        p = self.patch
        x = image.reshape(B, C, H // p, p, W // p, p)
        x = x.transpose(0, 2, 4, 1, 3, 5)            # [B, H/p, W/p, C, p, p]
        return x.reshape(B * (H // p) * (W // p), C * p * p)

    def _encode_and_project_image(self, image):
        B = image.shape[0]
        patches = self._patchify(image)               # [B*Np, patch_dim]
        Np = patches.shape[0] // B
        proj = pallas_image_encode_project(           # fused encoder + projection
            patches, self.w_patch, self.b_patch, self.w_proj, self.b_proj)
        return proj.reshape(B, Np, self.d_model)      # bf16

    def _encode_text(self, text_ids):
        # TODO(synk): embedding gather kept in JAX (data-dependent row gather);
        # the matmul/elementwise hot paths are in Pallas.
        return jnp.take(self.embed, text_ids, axis=0)  # [B, S_txt, D] bf16

    def __call__(self, image, text):
        image_embeddings = self._encode_and_project_image(image)    # [B, Np, D]
        text_embeddings = self._encode_text(text)                   # [B, S, D]
        joint_in = jnp.concatenate([image_embeddings, text_embeddings], axis=1)
        B, S, D = joint_in.shape
        joint = pallas_multimodal_block(
            joint_in.reshape(B * S, D),
            self.w_mm, self.b_mm, self.ln_gamma, self.ln_beta,
        )
        return joint.reshape(B, S, D)


# ----------------------------------------------------------------------------
if __name__ == "__main__":
    key = jax.random.PRNGKey(0)
    k_img, k_txt, k_params = jax.random.split(key, 3)

    B, C, H, W = 2, 4, 16, 16          # image NCHW
    patch = 8                           # -> 4 patches per image
    d_img, d_model = 128, 128
    S_txt, vocab = 8, 32

    image = jax.random.normal(k_img, (B, C, H, W), jnp.float32)
    text = jax.random.randint(k_txt, (B, S_txt), 0, vocab, jnp.int32)

    model = LLaVAPallas(channels=C, patch=patch, d_img=d_img,
                        d_model=d_model, vocab=vocab, key=k_params)

    out = jax.block_until_ready(model(image, text))
    assert out.shape == (B, (H // patch) * (W // patch) + S_txt, d_model)
    assert jnp.all(jnp.isfinite(out))
    print("KERNEL_OK")
</pallas_src>

<mosaic_0001>
module attributes {stable_mosaic.version = 11 : i64} {
  func.func @_image_encode_project_kernel(%arg0: i32, %arg1: memref<8x256xbf16, #tpu.memory_space<vmem>>, %arg2: memref<256x128xbf16, #tpu.memory_space<vmem>>, %arg3: memref<1x128xf32, #tpu.memory_space<vmem>>, %arg4: memref<128x128xbf16, #tpu.memory_space<vmem>>, %arg5: memref<1x128xf32, #tpu.memory_space<vmem>>, %arg6: memref<8x128xbf16, #tpu.memory_space<vmem>>) attributes {dimension_semantics = [#tpu.dimension_semantics<parallel>], iteration_bounds = array<i64: 1>, scalar_prefetch = 0 : i64, scratch_operands = 0 : i64, tpu.core_type = #tpu.core_type<tc>, window_params = [{transform_indices = @transform_0, window_bounds = array<i64: 8, 256>}, {pipeline_mode = #tpu.pipeline_mode<synchronous>, transform_indices = @transform_1, window_bounds = array<i64: 256, 128>}, {pipeline_mode = #tpu.pipeline_mode<synchronous>, transform_indices = @transform_2, window_bounds = array<i64: 1, 128>}, {pipeline_mode = #tpu.pipeline_mode<synchronous>, transform_indices = @transform_3, window_bounds = array<i64: 128, 128>}, {pipeline_mode = #tpu.pipeline_mode<synchronous>, transform_indices = @transform_4, window_bounds = array<i64: 1, 128>}, {transform_indices = @transform_5, window_bounds = array<i64: 8, 128>}]} {
    %c0 = arith.constant 0 : index
    %c0_0 = arith.constant 0 : index
    %0 = vector.load %arg1[%c0, %c0_0] : memref<8x256xbf16, #tpu.memory_space<vmem>>, vector<8x256xbf16>
    %c0_1 = arith.constant 0 : index
    %c0_2 = arith.constant 0 : index
    %1 = vector.load %arg2[%c0_1, %c0_2] : memref<256x128xbf16, #tpu.memory_space<vmem>>, vector<256x128xbf16>
    %cst = arith.constant dense<0.000000e+00> : vector<8x128xf32>
    %2 = tpu.matmul %0, %1, %cst {dimension_numbers = #tpu.dot_dimension_numbers<[1], [0], [0], [1], [0, 0, 1, 1], [], []>} : vector<8x256xbf16>, vector<256x128xbf16>, vector<8x128xf32> -> vector<8x128xf32>
    %c0_3 = arith.constant 0 : index
    %c0_4 = arith.constant 0 : index
    %3 = vector.load %arg3[%c0_3, %c0_4] : memref<1x128xf32, #tpu.memory_space<vmem>>, vector<1x128xf32>
    %4 = vector.broadcast %3 : vector<1x128xf32> to vector<8x128xf32>
    %5 = arith.addf %2, %4 : vector<8x128xf32>
    %6 = arith.truncf %5 : vector<8x128xf32> to vector<8x128xbf16>
    %c0_5 = arith.constant 0 : index
    %c0_6 = arith.constant 0 : index
    %7 = vector.load %arg4[%c0_5, %c0_6] : memref<128x128xbf16, #tpu.memory_space<vmem>>, vector<128x128xbf16>
    %cst_7 = arith.constant dense<0.000000e+00> : vector<8x128xf32>
    %8 = tpu.matmul %6, %7, %cst_7 {dimension_numbers = #tpu.dot_dimension_numbers<[1], [0], [0], [1], [0, 0, 1, 1], [], []>} : vector<8x128xbf16>, vector<128x128xbf16>, vector<8x128xf32> -> vector<8x128xf32>
    %c0_8 = arith.constant 0 : index
    %c0_9 = arith.constant 0 : index
    %9 = vector.load %arg5[%c0_8, %c0_9] : memref<1x128xf32, #tpu.memory_space<vmem>>, vector<1x128xf32>
    %10 = vector.broadcast %9 : vector<1x128xf32> to vector<8x128xf32>
    %11 = arith.addf %8, %10 : vector<8x128xf32>
    %12 = arith.truncf %11 : vector<8x128xf32> to vector<8x128xbf16>
    %c0_10 = arith.constant 0 : index
    %c0_11 = arith.constant 0 : index
    %13 = vector.load %arg6[%c0_10, %c0_11] : memref<8x128xbf16, #tpu.memory_space<vmem>>, vector<8x128xbf16>
    tpu.vector_store %arg6[%c0_10, %c0_11], %12 {strides = array<i32>} : memref<8x128xbf16, #tpu.memory_space<vmem>>, vector<8x128xbf16>,
    return
  }
  func.func @transform_0(%arg0: i32) -> (i32, i32) {
    %c0_i32 = arith.constant 0 : i32
    %c0_i32_0 = arith.constant 0 : i32
    return %arg0, %c0_i32 : i32, i32
  }
  func.func @transform_1(%arg0: i32) -> (i32, i32) {
    %c0_i32 = arith.constant 0 : i32
    %c0_i32_0 = arith.constant 0 : i32
    %c0_i32_1 = arith.constant 0 : i32
    return %c0_i32, %c0_i32_0 : i32, i32
  }
  func.func @transform_2(%arg0: i32) -> (i32, i32) {
    %c0_i32 = arith.constant 0 : i32
    %c0_i32_0 = arith.constant 0 : i32
    %c0_i32_1 = arith.constant 0 : i32
    return %c0_i32, %c0_i32_0 : i32, i32
  }
  func.func @transform_3(%arg0: i32) -> (i32, i32) {
    %c0_i32 = arith.constant 0 : i32
    %c0_i32_0 = arith.constant 0 : i32
    %c0_i32_1 = arith.constant 0 : i32
    return %c0_i32, %c0_i32_0 : i32, i32
  }
  func.func @transform_4(%arg0: i32) -> (i32, i32) {
    %c0_i32 = arith.constant 0 : i32
    %c0_i32_0 = arith.constant 0 : i32
    %c0_i32_1 = arith.constant 0 : i32
    return %c0_i32, %c0_i32_0 : i32, i32
  }
  func.func @transform_5(%arg0: i32) -> (i32, i32) {
    %c0_i32 = arith.constant 0 : i32
    %c0_i32_0 = arith.constant 0 : i32
    return %arg0, %c0_i32 : i32, i32
  }
}

</mosaic_0001>

<llo_original>
// kernel: tpu_custom_call.1
$region0: #{tpu_custom_call.1}
  #allocation0 [shape = 'u32[]', space=smem, size = 0x4, offset = 0x4, fixed_abs, tag = 'smem constant byte address 0x4 - core index']
  #allocation1 [shape = 'u32[144,128]{1,0:T(1,128)}', space=vmem, size = 0x12000, scoped, tag = 'internal scratch']
  %s0 = inlined_call_operand.hbm [shape: bf16[8,256], index: 0, kind: input, shape index: {}]
  %s1 = inlined_call_operand.hbm [shape: bf16[256,128], index: 1, kind: input, shape index: {}]
  %s2 = inlined_call_operand.hbm [shape: f32[1,128], index: 2, kind: input, shape index: {}]
  %s3 = inlined_call_operand.hbm [shape: bf16[128,128], index: 3, kind: input, shape index: {}]
  %s4 = inlined_call_operand.hbm [shape: f32[1,128], index: 4, kind: input, shape index: {}]
  %s5 = inlined_call_operand.hbm [shape: bf16[8,128], index: 5, kind: output, shape index: {}]
  %s6 = sld [smem:[#allocation0]]
  $region50: #{tpu_custom_call.1} parent=0
    _
  %s8 = ssub.s32 1, %s6
  %s9 = scalar_select 0, %s8, %s6
  $region1: #{tpu_custom_call.1} parent=0
    #allocation2 [shape = 'u8[4096]{0}', space=vmem, size = 0x1000, scoped, tag = 'input window, operand 0, single buffered']
    #allocation3 [shape = 's32[1]{0}', space=sflag, size = 0x4, scoped, tag = 'scoped memory for tpu_custom_call.1']
    #allocation4 [shape = 's32[1]{0}', space=sflag, size = 0x4, scoped, tag = 'scoped memory for tpu_custom_call.1']
    #allocation5 [shape = 'u8[65536]{0}', space=vmem, size = 0x10000, scoped, tag = 'input window, operand 1, single buffered']
    #allocation6 [shape = 's32[1]{0}', space=sflag, size = 0x4, scoped, tag = 'scoped memory for tpu_custom_call.1']
    #allocation7 [shape = 'u8[512]{0}', space=vmem, size = 0x400, scoped, tag = 'input window, operand 2, single buffered']
    #allocation8 [shape = 'u8[32768]{0}', space=vmem, size = 0x8000, scoped, tag = 'input window, operand 3, single buffered']
    #allocation9 [shape = 's32[1]{0}', space=sflag, size = 0x4, scoped, tag = 'scoped memory for tpu_custom_call.1']
    #allocation10 [shape = 'u8[512]{0}', space=vmem, size = 0x400, scoped, tag = 'input window, operand 4, single buffered']
    #allocation11 [shape = 'u8[2048]{0}', space=vmem, size = 0x800, scoped, tag = 'output window, operand 0, single buffered']
    %10 = vsyncpa [#allocation3], 0
    %11 = vsyncpa [#allocation6], 0
    %12 = vsyncpa [#allocation9], 0
    %13 = vsyncpa [#allocation4], 0
    // Predicated region
    $region2: #{tpu_custom_call.1} parent=1 // pred_check
      _
    $region3: #{tpu_custom_call.1} parent=1 // pred_check_branch
      %15 = sbr.rel (0) target = $region5
    $region4: #{tpu_custom_call.1} parent=1 // pred_region
      %s17 = ssub.s32 128, 128
      %18 = vsyncadd [#allocation3], %s17
      %s20 = sshll.u32 [#allocation2], 4
      %s21 = int_to_ptr.vmem [resolvable:$true] %s20
      %23 = dma.hbm_to_vmem [thread:$0]  %s0, 128, %s21, [#allocation3]
    $region5: #{tpu_custom_call.1} parent=1 // pred_fallthru
      _
    // Predicated region
    $region6: #{tpu_custom_call.1} parent=1 // pred_check
      _
    $region7: #{tpu_custom_call.1} parent=1 // pred_check_branch
      %25 = sbr.rel (0) target = $region9
    $region8: #{tpu_custom_call.1} parent=1 // pred_region
      %s27 = ssub.s32 2048, 2048
      %28 = vsyncadd [#allocation6], %s27
      %s29 = sshll.u32 [#allocation5], 4
      %s30 = int_to_ptr.vmem [resolvable:$true] %s29
      %35 = dma.hbm_to_vmem [thread:$0]  %s1, 2048, %s30, [#allocation6], 64, 64, 4
    $region9: #{tpu_custom_call.1} parent=1 // pred_fallthru
      _
    // Predicated region
    $region10: #{tpu_custom_call.1} parent=1 // pred_check
      _
    $region11: #{tpu_custom_call.1} parent=1 // pred_check_branch
      %37 = sbr.rel (0) target = $region13
    $region12: #{tpu_custom_call.1} parent=1 // pred_region
      %s39 = ssub.s32 16, 16
      %40 = vsyncadd [#allocation6], %s39
      %s42 = sshll.u32 [#allocation7], 4
      %s43 = int_to_ptr.vmem [resolvable:$true] %s42
      %45 = dma.hbm_to_vmem [thread:$0]  %s2, 16, %s43, [#allocation6]
    $region13: #{tpu_custom_call.1} parent=1 // pred_fallthru
      _
    // Predicated region
    $region14: #{tpu_custom_call.1} parent=1 // pred_check
      _
    $region15: #{tpu_custom_call.1} parent=1 // pred_check_branch
      %47 = sbr.rel (0) target = $region17
    $region16: #{tpu_custom_call.1} parent=1 // pred_region
      %s49 = ssub.s32 1024, 1024
      %50 = vsyncadd [#allocation9], %s49
      %s51 = sshll.u32 [#allocation8], 4
      %s52 = int_to_ptr.vmem [resolvable:$true] %s51
      %57 = dma.hbm_to_vmem [thread:$0]  %s3, 1024, %s52, [#allocation9], 64, 64, 4
    $region17: #{tpu_custom_call.1} parent=1 // pred_fallthru
      _
    // Predicated region
    $region18: #{tpu_custom_call.1} parent=1 // pred_check
      _
    $region19: #{tpu_custom_call.1} parent=1 // pred_check_branch
      %59 = sbr.rel (0) target = $region21
    $region20: #{tpu_custom_call.1} parent=1 // pred_region
      %s61 = ssub.s32 16, 16
      %62 = vsyncadd [#allocation9], %s61
      %s64 = sshll.u32 [#allocation10], 4
      %s65 = int_to_ptr.vmem [resolvable:$true] %s64
      %67 = dma.hbm_to_vmem [thread:$0]  %s4, 16, %s65, [#allocation9]
    $region21: #{tpu_custom_call.1} parent=1 // pred_fallthru
      _
    // Predicated region
    $region22: #{tpu_custom_call.1} parent=1 // pred_check
      _
    $region23: #{tpu_custom_call.1} parent=1 // pred_check_branch
      %69 = sbr.rel (0) target = $region25
    $region24: #{tpu_custom_call.1} parent=1 // pred_region
      %70 = dma.done [#allocation3], 128
    $region25: #{tpu_custom_call.1} parent=1 // pred_fallthru
      _
    // Predicated region
    $region26: #{tpu_custom_call.1} parent=1 // pred_check
      _
    $region27: #{tpu_custom_call.1} parent=1 // pred_check_branch
      %72 = sbr.rel (0) target = $region29
    $region28: #{tpu_custom_call.1} parent=1 // pred_region
      %73 = dma.done [#allocation6], 2048
    $region29: #{tpu_custom_call.1} parent=1 // pred_fallthru
      _
    // Predicated region
    $region30: #{tpu_custom_call.1} parent=1 // pred_check
      _
    $region31: #{tpu_custom_call.1} parent=1 // pred_check_branch
      %75 = sbr.rel (0) target = $region33
    $region32: #{tpu_custom_call.1} parent=1 // pred_region
      %76 = dma.done [#allocation6], 16
    $region33: #{tpu_custom_call.1} parent=1 // pred_fallthru
      _
    // Predicated region
    $region34: #{tpu_custom_call.1} parent=1 // pred_check
      _
    $region35: #{tpu_custom_call.1} parent=1 // pred_check_branch
      %78 = sbr.rel (0) target = $region37
    $region36: #{tpu_custom_call.1} parent=1 // pred_region
      %79 = dma.done [#allocation9], 1024
    $region37: #{tpu_custom_call.1} parent=1 // pred_fallthru
      _
    // Predicated region
    $region38: #{tpu_custom_call.1} parent=1 // pred_check
      _
    $region39: #{tpu_custom_call.1} parent=1 // pred_check_branch
      %81 = sbr.rel (0) target = $region41
    $region40: #{tpu_custom_call.1} parent=1 // pred_region
      %82 = dma.done [#allocation9], 16
    $region41: #{tpu_custom_call.1} parent=1 // pred_fallthru
      _
    %v84 = vld [vmem:[#allocation2] sm:$0xff]
    %v85 = vld [vmem:[#allocation5] sm:$0xf]
    %v86 = vld [vmem:[#allocation5 + $0x4] sm:$0xf]
    %v87 = vld [vmem:[#allocation5 + $0x8] sm:$0xf]
    %v88 = vld [vmem:[#allocation5 + $0xc] sm:$0xf]
    %v89 = vld [vmem:[#allocation5 + $0x10] sm:$0xf]
    %v90 = vld [vmem:[#allocation5 + $0x14] sm:$0xf]
    %v91 = vld [vmem:[#allocation5 + $0x18] sm:$0xf]
    %v92 = vld [vmem:[#allocation5 + $0x1c] sm:$0xf]
    %v93 = vld [vmem:[#allocation5 + $0x20] sm:$0xf]
    %v94 = vld [vmem:[#allocation5 + $0x24] sm:$0xf]
    %v95 = vld [vmem:[#allocation5 + $0x28] sm:$0xf]
    %v96 = vld [vmem:[#allocation5 + $0x2c] sm:$0xf]
    %v97 = vld [vmem:[#allocation5 + $0x30] sm:$0xf]
    %v98 = vld [vmem:[#allocation5 + $0x34] sm:$0xf]
    %v99 = vld [vmem:[#allocation5 + $0x38] sm:$0xf]
    %v100 = vld [vmem:[#allocation5 + $0x3c] sm:$0xf]
    %v101 = vld [vmem:[#allocation5 + $0x40] sm:$0xf]
    %v102 = vld [vmem:[#allocation5 + $0x44] sm:$0xf]
    %v103 = vld [vmem:[#allocation5 + $0x48] sm:$0xf]
    %v104 = vld [vmem:[#allocation5 + $0x4c] sm:$0xf]
    %v105 = vld [vmem:[#allocation5 + $0x50] sm:$0xf]
    %v106 = vld [vmem:[#allocation5 + $0x54] sm:$0xf]
    %v107 = vld [vmem:[#allocation5 + $0x58] sm:$0xf]
    %v108 = vld [vmem:[#allocation5 + $0x5c] sm:$0xf]
    %v109 = vld [vmem:[#allocation5 + $0x60] sm:$0xf]
    %v110 = vld [vmem:[#allocation5 + $0x64] sm:$0xf]
    %v111 = vld [vmem:[#allocation5 + $0x68] sm:$0xf]
    %v112 = vld [vmem:[#allocation5 + $0x6c] sm:$0xf]
    %v113 = vld [vmem:[#allocation5 + $0x70] sm:$0xf]
    %v114 = vld [vmem:[#allocation5 + $0x74] sm:$0xf]
    %v115 = vld [vmem:[#allocation5 + $0x78] sm:$0xf]
    %v116 = vld [vmem:[#allocation5 + $0x7c] sm:$0xf]
    %v117 = vld [vmem:[#allocation7] sm:$0x1]
    %v119 = vlaneseq
    %v120 = vshrl.u32 %v119, 7
    %v121 = vsub.s32 0, %v120
    %v122 = vrot.slane %v117, %v121
    %v125 = vunpack.c.l.b16 %v84
    %v126 = vunpack.c.h.b16 %v84
    %v127 = vpack.c.b16 %v125, %v125
    %v128 = vpack.c.b16 %v126, %v126
    %v163 = vunpack.c.l.b16 %v85
    %v164 = vunpack.c.l.b16 %v86
    %v165 = vunpack.c.l.b16 %v87
    %v166 = vunpack.c.l.b16 %v88
    %v167 = vunpack.c.l.b16 %v89
    %v168 = vunpack.c.l.b16 %v90
    %v169 = vunpack.c.l.b16 %v91
    %v170 = vunpack.c.l.b16 %v92
    %v171 = vunpack.c.l.b16 %v93
    %v172 = vunpack.c.l.b16 %v94
    %v173 = vunpack.c.l.b16 %v95
    %v174 = vunpack.c.l.b16 %v96
    %v175 = vunpack.c.l.b16 %v97
    %v176 = vunpack.c.l.b16 %v98
    %v177 = vunpack.c.l.b16 %v99
    %v178 = vunpack.c.l.b16 %v100
    %v179 = vunpack.c.l.b16 %v101
    %v180 = vunpack.c.l.b16 %v102
    %v181 = vunpack.c.l.b16 %v103
    %v182 = vunpack.c.l.b16 %v104
    %v183 = vunpack.c.l.b16 %v105
    %v184 = vunpack.c.l.b16 %v106
    %v185 = vunpack.c.l.b16 %v107
    %v186 = vunpack.c.l.b16 %v108
    %v187 = vunpack.c.l.b16 %v109
    %v188 = vunpack.c.l.b16 %v110
    %v189 = vunpack.c.l.b16 %v111
    %v190 = vunpack.c.l.b16 %v112
    %v191 = vunpack.c.l.b16 %v113
    %v192 = vunpack.c.l.b16 %v114
    %v193 = vunpack.c.l.b16 %v115
    %v194 = vunpack.c.l.b16 %v116
    %v195 = vpack.c.b16 %v164, %v163
    %v196 = vpack.c.b16 %v166, %v165
    %v197 = vpack.c.b16 %v168, %v167
    %v198 = vpack.c.b16 %v170, %v169
    %v199 = vpack.c.b16 %v172, %v171
    %v200 = vpack.c.b16 %v174, %v173
    %v201 = vpack.c.b16 %v176, %v175
    %v202 = vpack.c.b16 %v178, %v177
    %v203 = vpack.c.b16 %v180, %v179
    %v204 = vpack.c.b16 %v182, %v181
    %v205 = vpack.c.b16 %v184, %v183
    %v206 = vpack.c.b16 %v186, %v185
    %v207 = vpack.c.b16 %v188, %v187
    %v208 = vpack.c.b16 %v190, %v189
    %v209 = vpack.c.b16 %v192, %v191
    %v210 = vpack.c.b16 %v194, %v193
    %227 = vmatprep.subr.bf16.mxu0 0
    %228 = vmatpush1.bf16.msra.mxu0 %v195
    %229 = vmatprep.subr.bf16.mxu0 0
    %230 = vmatpush1.bf16.msra.mxu0 %v196
    %231 = vmatprep.subr.bf16.mxu0 0
    %232 = vmatpush1.bf16.msra.mxu0 %v197
    %233 = vmatprep.subr.bf16.mxu0 0
    %234 = vmatpush1.bf16.msra.mxu0 %v198
    %235 = vmatprep.subr.bf16.mxu0 0
    %236 = vmatpush1.bf16.msra.mxu0 %v199
    %237 = vmatprep.subr.bf16.mxu0 0
    %238 = vmatpush1.bf16.msra.mxu0 %v200
    %239 = vmatprep.subr.bf16.mxu0 0
    %240 = vmatpush1.bf16.msra.mxu0 %v201
    %241 = vmatprep.subr.bf16.mxu0 0
    %242 = vmatpush1.bf16.msra.mxu0 %v202
    %243 = vmatprep.subr.bf16.mxu0 0
    %244 = vmatpush1.bf16.msra.mxu0 %v203
    %245 = vmatprep.subr.bf16.mxu0 0
    %246 = vmatpush1.bf16.msra.mxu0 %v204
    %247 = vmatprep.subr.bf16.mxu0 0
    %248 = vmatpush1.bf16.msra.mxu0 %v205
    %249 = vmatprep.subr.bf16.mxu0 0
    %250 = vmatpush1.bf16.msra.mxu0 %v206
    %251 = vmatprep.subr.bf16.mxu0 0
    %252 = vmatpush1.bf16.msra.mxu0 %v207
    %253 = vmatprep.subr.bf16.mxu0 0
    %254 = vmatpush1.bf16.msra.mxu0 %v208
    %255 = vmatprep.subr.bf16.mxu0 0
    %256 = vmatpush1.bf16.msra.mxu0 %v209
    %257 = vmatprep.subr.bf16.mxu0 0
    %258 = vmatpush1.bf16.msra.mxu0 %v210
    %259 = vmatprep.mubr.bf16.mxu0 %v128
    %260 = vmatmul.mubr.bf16.gmra.mrb[0].mxu0 %v127
    %v261 = vpop.f32.mrb[0].mxu0
    %v262 = vadd.f32 %v122, %v261
    %v263 = vpop.f32.mrb[0].mxu0
    %v264 = vpop.f32.mrb[0].mxu0
    %v265 = vpop.f32.mrb[0].mxu0
    %266 = vdwg.mxu0
    %v267 = vpack.c.bf16 %v262, %v262
    %v268 = vld [vmem:[#allocation8] sm:$0xf]
    %v269 = vld [vmem:[#allocation8 + $0x4] sm:$0xf]
    %v270 = vld [vmem:[#allocation8 + $0x8] sm:$0xf]
    %v271 = vld [vmem:[#allocation8 + $0xc] sm:$0xf]
    %v272 = vld [vmem:[#allocation8 + $0x10] sm:$0xf]
    %v273 = vld [vmem:[#allocation8 + $0x14] sm:$0xf]
    %v274 = vld [vmem:[#allocation8 + $0x18] sm:$0xf]
    %v275 = vld [vmem:[#allocation8 + $0x1c] sm:$0xf]
    %v276 = vld [vmem:[#allocation8 + $0x20] sm:$0xf]
    %v277 = vld [vmem:[#allocation8 + $0x24] sm:$0xf]
    %v278 = vld [vmem:[#allocation8 + $0x28] sm:$0xf]
    %v279 = vld [vmem:[#allocation8 + $0x2c] sm:$0xf]
    %v280 = vld [vmem:[#allocation8 + $0x30] sm:$0xf]
    %v281 = vld [vmem:[#allocation8 + $0x34] sm:$0xf]
    %v282 = vld [vmem:[#allocation8 + $0x38] sm:$0xf]
    %v283 = vld [vmem:[#allocation8 + $0x3c] sm:$0xf]
    %v284 = vld [vmem:[#allocation10] sm:$0x1]
    %v286 = vlaneseq
    %v287 = vshrl.u32 %v286, 7
    %v288 = vsub.s32 0, %v287
    %v289 = vrot.slane %v284, %v288
    %v307 = vunpack.c.l.b16 %v268
    %v308 = vunpack.c.l.b16 %v269
    %v309 = vunpack.c.l.b16 %v270
    %v310 = vunpack.c.l.b16 %v271
    %v311 = vunpack.c.l.b16 %v272
    %v312 = vunpack.c.l.b16 %v273
    %v313 = vunpack.c.l.b16 %v274
    %v314 = vunpack.c.l.b16 %v275
    %v315 = vunpack.c.l.b16 %v276
    %v316 = vunpack.c.l.b16 %v277
    %v317 = vunpack.c.l.b16 %v278
    %v318 = vunpack.c.l.b16 %v279
    %v319 = vunpack.c.l.b16 %v280
    %v320 = vunpack.c.l.b16 %v281
    %v321 = vunpack.c.l.b16 %v282
    %v322 = vunpack.c.l.b16 %v283
    %v323 = vpack.c.b16 %v308, %v307
    %v324 = vpack.c.b16 %v310, %v309
    %v325 = vpack.c.b16 %v312, %v311
    %v326 = vpack.c.b16 %v314, %v313
    %v327 = vpack.c.b16 %v316, %v315
    %v328 = vpack.c.b16 %v318, %v317
    %v329 = vpack.c.b16 %v320, %v319
    %v330 = vpack.c.b16 %v322, %v321
    %339 = vmatprep.subr.bf16.mxu0 0
    %340 = vmatpush1.bf16.msra.mxu0 %v323
    %341 = vmatprep.subr.bf16.mxu0 0
    %342 = vmatpush1.bf16.msra.mxu0 %v324
    %343 = vmatprep.subr.bf16.mxu0 0
    %344 = vmatpush1.bf16.msra.mxu0 %v325
    %345 = vmatprep.subr.bf16.mxu0 0
    %346 = vmatpush1.bf16.msra.mxu0 %v326
    %347 = vmatprep.subr.bf16.mxu0 0
    %348 = vmatpush1.bf16.msra.mxu0 %v327
    %349 = vmatprep.subr.bf16.mxu0 0
    %350 = vmatpush1.bf16.msra.mxu0 %v328
    %351 = vmatprep.subr.bf16.mxu0 0
    %352 = vmatpush1.bf16.msra.mxu0 %v329
    %353 = vmatprep.subr.bf16.mxu0 0
    %354 = vmatpush1.bf16.msra.mxu0 %v330
    %355 = vmatprep.subr.bf16.mxu0 0
    %356 = vmatpush1.bf16.msra.mxu0 0
    %357 = vmatprep.subr.bf16.mxu0 0
    %358 = vmatpush1.bf16.msra.mxu0 0
    %359 = vmatprep.subr.bf16.mxu0 0
    %360 = vmatpush1.bf16.msra.mxu0 0
    %361 = vmatprep.subr.bf16.mxu0 0
    %362 = vmatpush1.bf16.msra.mxu0 0
    %363 = vmatprep.subr.bf16.mxu0 0
    %364 = vmatpush1.bf16.msra.mxu0 0
    %365 = vmatprep.subr.bf16.mxu0 0
    %366 = vmatpush1.bf16.msra.mxu0 0
    %367 = vmatprep.subr.bf16.mxu0 0
    %368 = vmatpush1.bf16.msra.mxu0 0
    %369 = vmatprep.subr.bf16.mxu0 0
    %370 = vmatpush1.bf16.msra.mxu0 0
    %371 = vmatprep.mubr.bf16.mxu0 0
    %372 = vmatmul.mubr.bf16.gmra.mrb[0].mxu0 %v267
    %v373 = vpop.f32.mrb[0].mxu0
    %v374 = vadd.f32 %v289, %v373
    %v375 = vpop.f32.mrb[0].mxu0
    %v376 = vpop.f32.mrb[0].mxu0
    %v377 = vpop.f32.mrb[0].mxu0
    %378 = vdwg.mxu0
    %v379 = vpack.c.bf16 %v374, %v374
    %380 = vst [vmem:[#allocation11] sm:$0xf] %v379
    // Predicated region
    $region42: #{tpu_custom_call.1} parent=1 // pred_check
      _
    $region43: #{tpu_custom_call.1} parent=1 // pred_check_branch
      %382 = sbr.rel (0) target = $region45
    $region44: #{tpu_custom_call.1} parent=1 // pred_region
      %s384 = ssub.s32 64, 64
      %385 = vsyncadd [#allocation4], %s384
      %s387 = sshll.u32 [#allocation11], 4
      %s388 = int_to_ptr.vmem [resolvable:$true] %s387
      %390 = dma.vmem_to_hbm [thread:$0]  %s388, 64, %s5, [#allocation4]
    $region45: #{tpu_custom_call.1} parent=1 // pred_fallthru
      _
    // Predicated region
    $region46: #{tpu_custom_call.1} parent=1 // pred_check
      _
    $region47: #{tpu_custom_call.1} parent=1 // pred_check_branch
      %392 = sbr.rel (0) target = $region49
    $region48: #{tpu_custom_call.1} parent=1 // pred_region
      %393 = dma.done [#allocation4], 64
    $region49: #{tpu_custom_call.1} parent=1 // pred_fallthru
      _
    %394 = vsyncpa [#allocation3], 1
    %395 = vsyncpa [#allocation6], 1
    %396 = vsyncpa [#allocation9], 1
    %397 = vsyncpa [#allocation4], 1

</llo_original>
